<compile_context>
chip_gen: v6e
topology: v6e:2x2x1
jax: 0.10.0
libtpu: 0.0.40
codegen_flags: <defaults>
</compile_context>

<pallas_src>
import jax
import jax.numpy as jnp
import numpy as np
from jax.experimental import pallas as pl
from jax.experimental.pallas import tpu as pltpu

HIDDEN = 100       # hidden_dim in the PyTorch module
EPS = 1e-5         # BatchNorm1d default eps
# 'small' conv config from the PyTorch module.
K1, K2, K3 = 2, 3, 4
C1, C2, C3 = 2, 3, 4
SLAB_LANES = 128   # single parameter slab lane width


def _softplus(x):
    # PyTorch nn.Softplus(beta=1, threshold=20)
    return jnp.where(x > 20.0, x, jnp.log1p(jnp.exp(jnp.minimum(x, 20.0))))


def _layout(V, L):
    """Row offsets (Python constants) of every parameter inside the single slab."""
    L1 = L - K1 + 1
    L2 = L1 - K2 + 1
    L3 = L2 - K3 + 1
    off = {}
    r = 0

    def take(name, n):
        nonlocal r
        off[name] = r
        r += n

    take('w1', K1 * V)        # im2col conv1 weight rows
    take('w2', K2 * C1)
    take('w3', K3 * C2)
    take('vec', 9)            # conv1_b, bn1_g, bn1_b, conv2_b, ..., bn3_b (1 row each)
    take('lin_w', L3 * C3)
    take('lin_b', 1)
    take('head_w', HIDDEN)
    take('head_b', 1)
    return off, r, (L1, L2, L3)


def pack_params(params, V, L, latent_dim):
    """Pack all parameters into one (rows, 128) f32 slab.  Run ONCE (params change
    rarely); not part of the per-step jitted forward."""
    off, total_rows, (L1, L2, L3) = _layout(V, L)
    f32 = jnp.float32

    def im2col_w(w, K, Cin):                 # torch (Cout, Cin, K) -> (K*Cin, Cout)
        return jnp.transpose(w.astype(f32), (2, 1, 0)).reshape(K * Cin, -1)

    def pad_lanes(a):
        return jnp.pad(a, ((0, 0), (0, SLAB_LANES - a.shape[1])))

    rows = [pad_lanes(im2col_w(params['conv1_w'], K1, V)),
            pad_lanes(im2col_w(params['conv2_w'], K2, C1)),
            pad_lanes(im2col_w(params['conv3_w'], K3, C2))]
    for k in ('conv1_b', 'bn1_g', 'bn1_b',
              'conv2_b', 'bn2_g', 'bn2_b',
              'conv3_b', 'bn3_g', 'bn3_b'):
        rows.append(pad_lanes(params[k].astype(f32).reshape(1, -1)))

    # Linear weight with columns permuted so that our (l, c)-ordered flatten matches
    # PyTorch's channels-first flatten index c*L3 + l:  W_flat[l*C3+c, j] = W[j, c*L3+l]
    lw = params['linear_w'].astype(f32).reshape(HIDDEN, C3, L3)
    rows.append(pad_lanes(jnp.transpose(lw, (2, 1, 0)).reshape(L3 * C3, HIDDEN)))
    rows.append(pad_lanes(params['linear_b'].astype(f32).reshape(1, HIDDEN)))

    # mu / sigma heads fused column-wise into one (HIDDEN, 2*latent) weight.
    head_w = jnp.concatenate([params['mu_w'].T, params['sigma_w'].T], axis=1).astype(f32)
    rows.append(pad_lanes(head_w))
    head_b = jnp.concatenate([params['mu_b'], params['sigma_b']]).astype(f32)
    rows.append(pad_lanes(head_b.reshape(1, 2 * latent_dim)))

    slab = jnp.concatenate(rows, axis=0)
    assert slab.shape == (total_rows, SLAB_LANES)
    return slab


def make_encoder_forward(B, L, V, latent_dim):
    """Build a forward(x, slab) -> (mu, sigma) callable around one pallas_call."""
    off, _, (L1, L2, L3) = _layout(V, L)
    o_vec = off['vec']
    D2 = 2 * latent_dim
    f32 = jnp.float32

    def im2col(h, Lin, Cin, K):
        # h: (B*Lin, Cin) batch-stacked value; returns (B*Lout, K*Cin) value.
        # Built entirely from static slices + concats: no scratch, no stores.
        # Windows never cross batch rows, so one matmul handles the whole layer.
        # With K == Lin (Lout == 1) this is exactly the (l, c)-ordered flatten.
        Lout = Lin - K + 1
        pieces = []
        for k in range(K):
            shifted = [h[b * Lin + k: b * Lin + k + Lout, :] for b in range(B)]
            pieces.append(shifted[0] if B == 1 else jnp.concatenate(shifted, axis=0))
        return pieces[0] if K == 1 else jnp.concatenate(pieces, axis=1)

    def kernel(x_ref, p_ref, out_ref):
        def conv_relu_bn(h, Lin, Cin, K, Cout, w_off, v_off):
            Lout = Lin - K + 1
            cols = im2col(h, Lin, Cin, K)                          # (B*Lout, K*Cin)
            w = p_ref[w_off: w_off + K * Cin, 0:Cout]
            bias = p_ref[v_off + 0: v_off + 1, 0:Cout]
            gamma = p_ref[v_off + 1: v_off + 2, 0:Cout]
            beta = p_ref[v_off + 2: v_off + 3, 0:Cout]
            y = jnp.dot(cols, w, preferred_element_type=jnp.float32) + bias
            y = jnp.maximum(y, 0.0)                                # ReLU BEFORE BatchNorm
            # Training-mode BatchNorm1d: biased per-channel stats over (batch, length).
            # Two-pass variance kept for numerical safety (review: one-pass optional).
            n = float(B * Lout)
            mean = jnp.sum(y, axis=0, keepdims=True) / n
            d = y - mean
            var = jnp.sum(d * d, axis=0, keepdims=True) / n
            return d * jax.lax.rsqrt(var + EPS) * gamma + beta

        h = x_ref[...]                                                    # (B*L, V)
        h = conv_relu_bn(h, L, V, K1, C1, off['w1'], o_vec + 0)           # (B*L1, C1)
        h = conv_relu_bn(h, L1, C1, K2, C2, off['w2'], o_vec + 3)         # (B*L2, C2)
        h = conv_relu_bn(h, L2, C2, K3, C3, off['w3'], o_vec + 6)         # (B*L3, C3)

        # Channels-first flatten as a value (im2col with a full-length window);
        # PyTorch's c*L3+l ordering is absorbed in the pre-permuted linear weight.
        hflat = im2col(h, L3, C3, L3)                                     # (B, L3*C3)
        wl = p_ref[off['lin_w']: off['lin_w'] + L3 * C3, 0:HIDDEN]
        bl = p_ref[off['lin_b']: off['lin_b'] + 1, 0:HIDDEN]
        hid = jnp.maximum(
            jnp.dot(hflat, wl, preferred_element_type=jnp.float32) + bl, 0.0)   # (B, 100)

        # Fused mu/sigma heads: one matmul, one contiguous output store.
        wh = p_ref[off['head_w']: off['head_w'] + HIDDEN, 0:D2]
        bh = p_ref[off['head_b']: off['head_b'] + 1, 0:D2]
        out = jnp.dot(hid, wh, preferred_element_type=jnp.float32) + bh          # (B, 2*latent)
        lane = jax.lax.broadcasted_iota(jnp.int32, (B, D2), 1)
        out_ref[...] = jnp.where(lane < latent_dim, out, _softplus(out))

    fwd = pl.pallas_call(
        kernel,
        out_shape=jax.ShapeDtypeStruct((B, D2), f32),
        in_specs=[pl.BlockSpec(memory_space=pltpu.MemorySpace.VMEM),
                  pl.BlockSpec(memory_space=pltpu.MemorySpace.VMEM)],
        out_specs=pl.BlockSpec(memory_space=pltpu.MemorySpace.VMEM),
    )

    def forward(x, slab):
        musig = fwd(x.astype(f32).reshape(B * L, V), slab)
        return musig[:, :latent_dim], musig[:, latent_dim:2 * latent_dim]

    return forward


def init_params(key, latent_dim, vocab_size, expr_length):
    """Deterministic synthetic parameters with the PyTorch module's shapes ('small' config)."""
    L3 = expr_length - 2 - 3 - 4 + 3
    out_dim = 4 * L3
    ks = jax.random.split(key, 18)

    def uni(k, shape, fan_in):
        b = 1.0 / np.sqrt(fan_in)
        return jax.random.uniform(k, shape, jnp.float32, -b, b)

    return {
        'conv1_w': uni(ks[0], (2, vocab_size, 2), vocab_size * 2),
        'conv1_b': uni(ks[1], (2,), vocab_size * 2),
        'bn1_g': 1.0 + 0.1 * jax.random.normal(ks[2], (2,), jnp.float32),
        'bn1_b': 0.1 * jax.random.normal(ks[3], (2,), jnp.float32),
        'conv2_w': uni(ks[4], (3, 2, 3), 2 * 3),
        'conv2_b': uni(ks[5], (3,), 2 * 3),
        'bn2_g': 1.0 + 0.1 * jax.random.normal(ks[6], (3,), jnp.float32),
        'bn2_b': 0.1 * jax.random.normal(ks[7], (3,), jnp.float32),
        'conv3_w': uni(ks[8], (4, 3, 4), 3 * 4),
        'conv3_b': uni(ks[9], (4,), 3 * 4),
        'bn3_g': 1.0 + 0.1 * jax.random.normal(ks[10], (4,), jnp.float32),
        'bn3_b': 0.1 * jax.random.normal(ks[11], (4,), jnp.float32),
        'linear_w': uni(ks[12], (HIDDEN, out_dim), out_dim),
        'linear_b': uni(ks[13], (HIDDEN,), out_dim),
        'mu_w': uni(ks[14], (latent_dim, HIDDEN), HIDDEN),
        'mu_b': uni(ks[15], (latent_dim,), HIDDEN),
        'sigma_w': uni(ks[16], (latent_dim, HIDDEN), HIDDEN),
        'sigma_b': uni(ks[17], (latent_dim,), HIDDEN),
    }


def encoder_forward_ref(x, params):
    """Pure-JAX reference mirroring the PyTorch forward exactly (NCL layout)."""
    xt = jnp.transpose(x.astype(jnp.float32), (0, 2, 1))        # (B, V, L)

    def conv(h, w, b):
        out = jax.lax.conv_general_dilated(h, w, window_strides=(1,), padding='VALID',
                                           dimension_numbers=('NCH', 'OIH', 'NCH'))
        return out + b[None, :, None]

    def bn(h, g, bt):
        mean = jnp.mean(h, axis=(0, 2), keepdims=True)
        var = jnp.mean((h - mean) ** 2, axis=(0, 2), keepdims=True)
        return (h - mean) / jnp.sqrt(var + EPS) * g[None, :, None] + bt[None, :, None]

    h = bn(jax.nn.relu(conv(xt, params['conv1_w'], params['conv1_b'])), params['bn1_g'], params['bn1_b'])
    h = bn(jax.nn.relu(conv(h, params['conv2_w'], params['conv2_b'])), params['bn2_g'], params['bn2_b'])
    h = bn(jax.nn.relu(conv(h, params['conv3_w'], params['conv3_b'])), params['bn3_g'], params['bn3_b'])
    hf = h.reshape(h.shape[0], -1)                               # channels-first flatten, like .view(B, -1)
    hid = jax.nn.relu(hf @ params['linear_w'].T + params['linear_b'])
    mu = hid @ params['mu_w'].T + params['mu_b']
    sigma = jax.nn.softplus(hid @ params['sigma_w'].T + params['sigma_b'])
    return mu, sigma


if __name__ == "__main__":
    B, L, V, LATENT = 2, 16, 12, 8       # batch, expr_length, vocab_size, latent_dim

    key = jax.random.PRNGKey(0)
    pkey, xkey = jax.random.split(key)
    params = init_params(pkey, LATENT, V, L)

    idx = jax.random.randint(xkey, (B, L), 0, V)
    x = jax.nn.one_hot(idx, V, dtype=jnp.float32)                # (B, L, V) one-hot rules

    # Parameter packing runs ONCE, outside the per-step jitted forward.
    slab = jax.block_until_ready(pack_params(params, V, L, LATENT))

    run = jax.jit(make_encoder_forward(B, L, V, LATENT))
    mu, sigma = jax.block_until_ready(run(x, slab))

    mu_ref, sigma_ref = encoder_forward_ref(x, params)
    np.testing.assert_allclose(np.asarray(mu), np.asarray(mu_ref), rtol=1e-3, atol=1e-3)
    np.testing.assert_allclose(np.asarray(sigma), np.asarray(sigma_ref), rtol=1e-3, atol=1e-3)

    print("KERNEL_OK")
</pallas_src>

<mosaic_0001>
module attributes {stable_mosaic.version = 11 : i64} {
  func.func @kernel(%arg0: memref<32x12xf32, #tpu.memory_space<vmem>>, %arg1: memref<193x128xf32, #tpu.memory_space<vmem>>, %arg2: memref<2x16xf32, #tpu.memory_space<vmem>>) attributes {dimension_semantics = [], scalar_prefetch = 0 : i64, scratch_operands = 0 : i64, tpu.core_type = #tpu.core_type<tc>} {
    %c0 = arith.constant 0 : index
    %c0_0 = arith.constant 0 : index
    %0 = vector.load %arg0[%c0, %c0_0] : memref<32x12xf32, #tpu.memory_space<vmem>>, vector<32x12xf32>
    %1 = vector.extract_strided_slice %0 {offsets = [0, 0], sizes = [15, 12], strides = [1, 1]} : vector<32x12xf32> to vector<15x12xf32>
    %2 = vector.extract_strided_slice %0 {offsets = [16, 0], sizes = [15, 12], strides = [1, 1]} : vector<32x12xf32> to vector<15x12xf32>
    %3 = tpu.concatenate %1, %2 in 0 : vector<15x12xf32>, vector<15x12xf32> -> vector<30x12xf32>
    %4 = vector.extract_strided_slice %0 {offsets = [1, 0], sizes = [15, 12], strides = [1, 1]} : vector<32x12xf32> to vector<15x12xf32>
    %5 = vector.extract_strided_slice %0 {offsets = [17, 0], sizes = [15, 12], strides = [1, 1]} : vector<32x12xf32> to vector<15x12xf32>
    %6 = tpu.concatenate %4, %5 in 0 : vector<15x12xf32>, vector<15x12xf32> -> vector<30x12xf32>
    %7 = tpu.concatenate %3, %6 in 1 : vector<30x12xf32>, vector<30x12xf32> -> vector<30x24xf32>
    %c0_1 = arith.constant 0 : index
    %c0_2 = arith.constant 0 : index
    %8 = vector.load %arg1[%c0_1, %c0_2] : memref<193x128xf32, #tpu.memory_space<vmem>>, vector<24x2xf32>
    %c42 = arith.constant 42 : index
    %c0_3 = arith.constant 0 : index
    %9 = vector.load %arg1[%c42, %c0_3] : memref<193x128xf32, #tpu.memory_space<vmem>>, vector<1x2xf32>
    %c43 = arith.constant 43 : index
    %c0_4 = arith.constant 0 : index
    %10 = vector.load %arg1[%c43, %c0_4] : memref<193x128xf32, #tpu.memory_space<vmem>>, vector<1x2xf32>
    %c44 = arith.constant 44 : index
    %c0_5 = arith.constant 0 : index
    %11 = vector.load %arg1[%c44, %c0_5] : memref<193x128xf32, #tpu.memory_space<vmem>>, vector<1x2xf32>
    %cst = arith.constant dense<0.000000e+00> : vector<30x2xf32>
    %12 = tpu.matmul %7, %8, %cst {dimension_numbers = #tpu.dot_dimension_numbers<[1], [0], [0], [1], [0, 0, 1, 1], [], []>} : vector<30x24xf32>, vector<24x2xf32>, vector<30x2xf32> -> vector<30x2xf32>
    %13 = vector.broadcast %9 : vector<1x2xf32> to vector<30x2xf32>
    %14 = arith.addf %12, %13 : vector<30x2xf32>
    %cst_6 = arith.constant 0.000000e+00 : f32
    %15 = vector.broadcast %cst_6 : f32 to vector<30x2xf32>
    %16 = arith.maximumf %14, %15 : vector<30x2xf32>
    %cst_7 = arith.constant dense<0.000000e+00> : vector<2xf32>
    %17 = vector.multi_reduction <add>, %16, %cst_7 [0] : vector<30x2xf32> to vector<2xf32>
    %18 = vector.shape_cast %17 : vector<2xf32> to vector<1x2xf32>
    %cst_8 = arith.constant 3.000000e+01 : f32
    %19 = vector.broadcast %cst_8 : f32 to vector<1x2xf32>
    %20 = arith.divf %18, %19 : vector<1x2xf32>
    %21 = vector.broadcast %20 : vector<1x2xf32> to vector<30x2xf32>
    %22 = arith.subf %16, %21 : vector<30x2xf32>
    %23 = arith.mulf %22, %22 : vector<30x2xf32>
    %cst_9 = arith.constant dense<0.000000e+00> : vector<2xf32>
    %24 = vector.multi_reduction <add>, %23, %cst_9 [0] : vector<30x2xf32> to vector<2xf32>
    %25 = vector.shape_cast %24 : vector<2xf32> to vector<1x2xf32>
    %cst_10 = arith.constant 3.000000e+01 : f32
    %26 = vector.broadcast %cst_10 : f32 to vector<1x2xf32>
    %27 = arith.divf %25, %26 : vector<1x2xf32>
    %cst_11 = arith.constant 9.99999974E-6 : f32
    %28 = vector.broadcast %cst_11 : f32 to vector<1x2xf32>
    %29 = arith.addf %27, %28 : vector<1x2xf32>
    %30 = math.rsqrt %29 : vector<1x2xf32>
    %31 = vector.broadcast %30 : vector<1x2xf32> to vector<30x2xf32>
    %32 = arith.mulf %22, %31 : vector<30x2xf32>
    %33 = vector.broadcast %10 : vector<1x2xf32> to vector<30x2xf32>
    %34 = arith.mulf %32, %33 : vector<30x2xf32>
    %35 = vector.broadcast %11 : vector<1x2xf32> to vector<30x2xf32>
    %36 = arith.addf %34, %35 : vector<30x2xf32>
    %37 = vector.extract_strided_slice %36 {offsets = [0, 0], sizes = [13, 2], strides = [1, 1]} : vector<30x2xf32> to vector<13x2xf32>
    %38 = vector.extract_strided_slice %36 {offsets = [15, 0], sizes = [13, 2], strides = [1, 1]} : vector<30x2xf32> to vector<13x2xf32>
    %39 = tpu.concatenate %37, %38 in 0 : vector<13x2xf32>, vector<13x2xf32> -> vector<26x2xf32>
    %40 = vector.extract_strided_slice %36 {offsets = [1, 0], sizes = [13, 2], strides = [1, 1]} : vector<30x2xf32> to vector<13x2xf32>
    %41 = vector.extract_strided_slice %36 {offsets = [16, 0], sizes = [13, 2], strides = [1, 1]} : vector<30x2xf32> to vector<13x2xf32>
    %42 = tpu.concatenate %40, %41 in 0 : vector<13x2xf32>, vector<13x2xf32> -> vector<26x2xf32>
    %43 = vector.extract_strided_slice %36 {offsets = [2, 0], sizes = [13, 2], strides = [1, 1]} : vector<30x2xf32> to vector<13x2xf32>
    %44 = vector.extract_strided_slice %36 {offsets = [17, 0], sizes = [13, 2], strides = [1, 1]} : vector<30x2xf32> to vector<13x2xf32>
    %45 = tpu.concatenate %43, %44 in 0 : vector<13x2xf32>, vector<13x2xf32> -> vector<26x2xf32>
    %46 = tpu.concatenate %39, %42, %45 in 1 : vector<26x2xf32>, vector<26x2xf32>, vector<26x2xf32> -> vector<26x6xf32>
    %c24 = arith.constant 24 : index
    %c0_12 = arith.constant 0 : index
    %47 = vector.load %arg1[%c24, %c0_12] : memref<193x128xf32, #tpu.memory_space<vmem>>, vector<6x3xf32>
    %c45 = arith.constant 45 : index
    %c0_13 = arith.constant 0 : index
    %48 = vector.load %arg1[%c45, %c0_13] : memref<193x128xf32, #tpu.memory_space<vmem>>, vector<1x3xf32>
    %c46 = arith.constant 46 : index
    %c0_14 = arith.constant 0 : index
    %49 = vector.load %arg1[%c46, %c0_14] : memref<193x128xf32, #tpu.memory_space<vmem>>, vector<1x3xf32>
    %c47 = arith.constant 47 : index
    %c0_15 = arith.constant 0 : index
    %50 = vector.load %arg1[%c47, %c0_15] : memref<193x128xf32, #tpu.memory_space<vmem>>, vector<1x3xf32>
    %cst_16 = arith.constant dense<0.000000e+00> : vector<26x3xf32>
    %51 = tpu.matmul %46, %47, %cst_16 {dimension_numbers = #tpu.dot_dimension_numbers<[1], [0], [0], [1], [0, 0, 1, 1], [], []>} : vector<26x6xf32>, vector<6x3xf32>, vector<26x3xf32> -> vector<26x3xf32>
    %52 = vector.broadcast %48 : vector<1x3xf32> to vector<26x3xf32>
    %53 = arith.addf %51, %52 : vector<26x3xf32>
    %cst_17 = arith.constant 0.000000e+00 : f32
    %54 = vector.broadcast %cst_17 : f32 to vector<26x3xf32>
    %55 = arith.maximumf %53, %54 : vector<26x3xf32>
    %cst_18 = arith.constant dense<0.000000e+00> : vector<3xf32>
    %56 = vector.multi_reduction <add>, %55, %cst_18 [0] : vector<26x3xf32> to vector<3xf32>
    %57 = vector.shape_cast %56 : vector<3xf32> to vector<1x3xf32>
    %cst_19 = arith.constant 2.600000e+01 : f32
    %58 = vector.broadcast %cst_19 : f32 to vector<1x3xf32>
    %59 = arith.divf %57, %58 : vector<1x3xf32>
    %60 = vector.broadcast %59 : vector<1x3xf32> to vector<26x3xf32>
    %61 = arith.subf %55, %60 : vector<26x3xf32>
    %62 = arith.mulf %61, %61 : vector<26x3xf32>
    %cst_20 = arith.constant dense<0.000000e+00> : vector<3xf32>
    %63 = vector.multi_reduction <add>, %62, %cst_20 [0] : vector<26x3xf32> to vector<3xf32>
    %64 = vector.shape_cast %63 : vector<3xf32> to vector<1x3xf32>
    %cst_21 = arith.constant 2.600000e+01 : f32
    %65 = vector.broadcast %cst_21 : f32 to vector<1x3xf32>
    %66 = arith.divf %64, %65 : vector<1x3xf32>
    %cst_22 = arith.constant 9.99999974E-6 : f32
    %67 = vector.broadcast %cst_22 : f32 to vector<1x3xf32>
    %68 = arith.addf %66, %67 : vector<1x3xf32>
    %69 = math.rsqrt %68 : vector<1x3xf32>
    %70 = vector.broadcast %69 : vector<1x3xf32> to vector<26x3xf32>
    %71 = arith.mulf %61, %70 : vector<26x3xf32>
    %72 = vector.broadcast %49 : vector<1x3xf32> to vector<26x3xf32>
    %73 = arith.mulf %71, %72 : vector<26x3xf32>
    %74 = vector.broadcast %50 : vector<1x3xf32> to vector<26x3xf32>
    %75 = arith.addf %73, %74 : vector<26x3xf32>
    %76 = vector.extract_strided_slice %75 {offsets = [0, 0], sizes = [10, 3], strides = [1, 1]} : vector<26x3xf32> to vector<10x3xf32>
    %77 = vector.extract_strided_slice %75 {offsets = [13, 0], sizes = [10, 3], strides = [1, 1]} : vector<26x3xf32> to vector<10x3xf32>
    %78 = tpu.concatenate %76, %77 in 0 : vector<10x3xf32>, vector<10x3xf32> -> vector<20x3xf32>
    %79 = vector.extract_strided_slice %75 {offsets = [1, 0], sizes = [10, 3], strides = [1, 1]} : vector<26x3xf32> to vector<10x3xf32>
    %80 = vector.extract_strided_slice %75 {offsets = [14, 0], sizes = [10, 3], strides = [1, 1]} : vector<26x3xf32> to vector<10x3xf32>
    %81 = tpu.concatenate %79, %80 in 0 : vector<10x3xf32>, vector<10x3xf32> -> vector<20x3xf32>
    %82 = vector.extract_strided_slice %75 {offsets = [2, 0], sizes = [10, 3], strides = [1, 1]} : vector<26x3xf32> to vector<10x3xf32>
    %83 = vector.extract_strided_slice %75 {offsets = [15, 0], sizes = [10, 3], strides = [1, 1]} : vector<26x3xf32> to vector<10x3xf32>
    %84 = tpu.concatenate %82, %83 in 0 : vector<10x3xf32>, vector<10x3xf32> -> vector<20x3xf32>
    %85 = vector.extract_strided_slice %75 {offsets = [3, 0], sizes = [10, 3], strides = [1, 1]} : vector<26x3xf32> to vector<10x3xf32>
    %86 = vector.extract_strided_slice %75 {offsets = [16, 0], sizes = [10, 3], strides = [1, 1]} : vector<26x3xf32> to vector<10x3xf32>
    %87 = tpu.concatenate %85, %86 in 0 : vector<10x3xf32>, vector<10x3xf32> -> vector<20x3xf32>
    %88 = tpu.concatenate %78, %81, %84, %87 in 1 : vector<20x3xf32>, vector<20x3xf32>, vector<20x3xf32>, vector<20x3xf32> -> vector<20x12xf32>
    %c30 = arith.constant 30 : index
    %c0_23 = arith.constant 0 : index
    %89 = vector.load %arg1[%c30, %c0_23] : memref<193x128xf32, #tpu.memory_space<vmem>>, vector<12x4xf32>
    %c48 = arith.constant 48 : index
    %c0_24 = arith.constant 0 : index
    %90 = vector.load %arg1[%c48, %c0_24] : memref<193x128xf32, #tpu.memory_space<vmem>>, vector<1x4xf32>
    %c49 = arith.constant 49 : index
    %c0_25 = arith.constant 0 : index
    %91 = vector.load %arg1[%c49, %c0_25] : memref<193x128xf32, #tpu.memory_space<vmem>>, vector<1x4xf32>
    %c50 = arith.constant 50 : index
    %c0_26 = arith.constant 0 : index
    %92 = vector.load %arg1[%c50, %c0_26] : memref<193x128xf32, #tpu.memory_space<vmem>>, vector<1x4xf32>
    %cst_27 = arith.constant dense<0.000000e+00> : vector<20x4xf32>
    %93 = tpu.matmul %88, %89, %cst_27 {dimension_numbers = #tpu.dot_dimension_numbers<[1], [0], [0], [1], [0, 0, 1, 1], [], []>} : vector<20x12xf32>, vector<12x4xf32>, vector<20x4xf32> -> vector<20x4xf32>
    %94 = vector.broadcast %90 : vector<1x4xf32> to vector<20x4xf32>
    %95 = arith.addf %93, %94 : vector<20x4xf32>
    %cst_28 = arith.constant 0.000000e+00 : f32
    %96 = vector.broadcast %cst_28 : f32 to vector<20x4xf32>
    %97 = arith.maximumf %95, %96 : vector<20x4xf32>
    %cst_29 = arith.constant dense<0.000000e+00> : vector<4xf32>
    %98 = vector.multi_reduction <add>, %97, %cst_29 [0] : vector<20x4xf32> to vector<4xf32>
    %99 = vector.shape_cast %98 : vector<4xf32> to vector<1x4xf32>
    %cst_30 = arith.constant 2.000000e+01 : f32
    %100 = vector.broadcast %cst_30 : f32 to vector<1x4xf32>
    %101 = arith.divf %99, %100 : vector<1x4xf32>
    %102 = vector.broadcast %101 : vector<1x4xf32> to vector<20x4xf32>
    %103 = arith.subf %97, %102 : vector<20x4xf32>
    %104 = arith.mulf %103, %103 : vector<20x4xf32>
    %cst_31 = arith.constant dense<0.000000e+00> : vector<4xf32>
    %105 = vector.multi_reduction <add>, %104, %cst_31 [0] : vector<20x4xf32> to vector<4xf32>
    %106 = vector.shape_cast %105 : vector<4xf32> to vector<1x4xf32>
    %cst_32 = arith.constant 2.000000e+01 : f32
    %107 = vector.broadcast %cst_32 : f32 to vector<1x4xf32>
    %108 = arith.divf %106, %107 : vector<1x4xf32>
    %cst_33 = arith.constant 9.99999974E-6 : f32
    %109 = vector.broadcast %cst_33 : f32 to vector<1x4xf32>
    %110 = arith.addf %108, %109 : vector<1x4xf32>
    %111 = math.rsqrt %110 : vector<1x4xf32>
    %112 = vector.broadcast %111 : vector<1x4xf32> to vector<20x4xf32>
    %113 = arith.mulf %103, %112 : vector<20x4xf32>
    %114 = vector.broadcast %91 : vector<1x4xf32> to vector<20x4xf32>
    %115 = arith.mulf %113, %114 : vector<20x4xf32>
    %116 = vector.broadcast %92 : vector<1x4xf32> to vector<20x4xf32>
    %117 = arith.addf %115, %116 : vector<20x4xf32>
    %118 = vector.extract_strided_slice %117 {offsets = [0, 0], sizes = [1, 4], strides = [1, 1]} : vector<20x4xf32> to vector<1x4xf32>
    %119 = vector.extract_strided_slice %117 {offsets = [10, 0], sizes = [1, 4], strides = [1, 1]} : vector<20x4xf32> to vector<1x4xf32>
    %120 = tpu.concatenate %118, %119 in 0 : vector<1x4xf32>, vector<1x4xf32> -> vector<2x4xf32>
    %121 = vector.extract_strided_slice %117 {offsets = [1, 0], sizes = [1, 4], strides = [1, 1]} : vector<20x4xf32> to vector<1x4xf32>
    %122 = vector.extract_strided_slice %117 {offsets = [11, 0], sizes = [1, 4], strides = [1, 1]} : vector<20x4xf32> to vector<1x4xf32>
    %123 = tpu.concatenate %121, %122 in 0 : vector<1x4xf32>, vector<1x4xf32> -> vector<2x4xf32>
    %124 = vector.extract_strided_slice %117 {offsets = [2, 0], sizes = [1, 4], strides = [1, 1]} : vector<20x4xf32> to vector<1x4xf32>
    %125 = vector.extract_strided_slice %117 {offsets = [12, 0], sizes = [1, 4], strides = [1, 1]} : vector<20x4xf32> to vector<1x4xf32>
    %126 = tpu.concatenate %124, %125 in 0 : vector<1x4xf32>, vector<1x4xf32> -> vector<2x4xf32>
    %127 = vector.extract_strided_slice %117 {offsets = [3, 0], sizes = [1, 4], strides = [1, 1]} : vector<20x4xf32> to vector<1x4xf32>
    %128 = vector.extract_strided_slice %117 {offsets = [13, 0], sizes = [1, 4], strides = [1, 1]} : vector<20x4xf32> to vector<1x4xf32>
    %129 = tpu.concatenate %127, %128 in 0 : vector<1x4xf32>, vector<1x4xf32> -> vector<2x4xf32>
    %130 = vector.extract_strided_slice %117 {offsets = [4, 0], sizes = [1, 4], strides = [1, 1]} : vector<20x4xf32> to vector<1x4xf32>
    %131 = vector.extract_strided_slice %117 {offsets = [14, 0], sizes = [1, 4], strides = [1, 1]} : vector<20x4xf32> to vector<1x4xf32>
    %132 = tpu.concatenate %130, %131 in 0 : vector<1x4xf32>, vector<1x4xf32> -> vector<2x4xf32>
    %133 = vector.extract_strided_slice %117 {offsets = [5, 0], sizes = [1, 4], strides = [1, 1]} : vector<20x4xf32> to vector<1x4xf32>
    %134 = vector.extract_strided_slice %117 {offsets = [15, 0], sizes = [1, 4], strides = [1, 1]} : vector<20x4xf32> to vector<1x4xf32>
    %135 = tpu.concatenate %133, %134 in 0 : vector<1x4xf32>, vector<1x4xf32> -> vector<2x4xf32>
    %136 = vector.extract_strided_slice %117 {offsets = [6, 0], sizes = [1, 4], strides = [1, 1]} : vector<20x4xf32> to vector<1x4xf32>
    %137 = vector.extract_strided_slice %117 {offsets = [16, 0], sizes = [1, 4], strides = [1, 1]} : vector<20x4xf32> to vector<1x4xf32>
    %138 = tpu.concatenate %136, %137 in 0 : vector<1x4xf32>, vector<1x4xf32> -> vector<2x4xf32>
    %139 = vector.extract_strided_slice %117 {offsets = [7, 0], sizes = [1, 4], strides = [1, 1]} : vector<20x4xf32> to vector<1x4xf32>
    %140 = vector.extract_strided_slice %117 {offsets = [17, 0], sizes = [1, 4], strides = [1, 1]} : vector<20x4xf32> to vector<1x4xf32>
    %141 = tpu.concatenate %139, %140 in 0 : vector<1x4xf32>, vector<1x4xf32> -> vector<2x4xf32>
    %142 = vector.extract_strided_slice %117 {offsets = [8, 0], sizes = [1, 4], strides = [1, 1]} : vector<20x4xf32> to vector<1x4xf32>
    %143 = vector.extract_strided_slice %117 {offsets = [18, 0], sizes = [1, 4], strides = [1, 1]} : vector<20x4xf32> to vector<1x4xf32>
    %144 = tpu.concatenate %142, %143 in 0 : vector<1x4xf32>, vector<1x4xf32> -> vector<2x4xf32>
    %145 = vector.extract_strided_slice %117 {offsets = [9, 0], sizes = [1, 4], strides = [1, 1]} : vector<20x4xf32> to vector<1x4xf32>
    %146 = vector.extract_strided_slice %117 {offsets = [19, 0], sizes = [1, 4], strides = [1, 1]} : vector<20x4xf32> to vector<1x4xf32>
    %147 = tpu.concatenate %145, %146 in 0 : vector<1x4xf32>, vector<1x4xf32> -> vector<2x4xf32>
    %148 = tpu.concatenate %120, %123, %126, %129, %132, %135, %138, %141, %144, %147 in 1 : vector<2x4xf32>, vector<2x4xf32>, vector<2x4xf32>, vector<2x4xf32>, vector<2x4xf32>, vector<2x4xf32>, vector<2x4xf32>, vector<2x4xf32>, vector<2x4xf32>, vector<2x4xf32> -> vector<2x40xf32>
    %c51 = arith.constant 51 : index
    %c0_34 = arith.constant 0 : index
    %149 = vector.load %arg1[%c51, %c0_34] : memref<193x128xf32, #tpu.memory_space<vmem>>, vector<40x100xf32>
    %c91 = arith.constant 91 : index
    %c0_35 = arith.constant 0 : index
    %150 = vector.load %arg1[%c91, %c0_35] : memref<193x128xf32, #tpu.memory_space<vmem>>, vector<1x100xf32>
    %cst_36 = arith.constant dense<0.000000e+00> : vector<2x100xf32>
    %151 = tpu.matmul %148, %149, %cst_36 {dimension_numbers = #tpu.dot_dimension_numbers<[1], [0], [0], [1], [0, 0, 1, 1], [], []>} : vector<2x40xf32>, vector<40x100xf32>, vector<2x100xf32> -> vector<2x100xf32>
    %152 = vector.broadcast %150 : vector<1x100xf32> to vector<2x100xf32>
    %153 = arith.addf %151, %152 : vector<2x100xf32>
    %cst_37 = arith.constant 0.000000e+00 : f32
    %154 = vector.broadcast %cst_37 : f32 to vector<2x100xf32>
    %155 = arith.maximumf %153, %154 : vector<2x100xf32>
    %c92 = arith.constant 92 : index
    %c0_38 = arith.constant 0 : index
    %156 = vector.load %arg1[%c92, %c0_38] : memref<193x128xf32, #tpu.memory_space<vmem>>, vector<100x16xf32>
    %c192 = arith.constant 192 : index
    %c0_39 = arith.constant 0 : index
    %157 = vector.load %arg1[%c192, %c0_39] : memref<193x128xf32, #tpu.memory_space<vmem>>, vector<1x16xf32>
    %cst_40 = arith.constant dense<0.000000e+00> : vector<2x16xf32>
    %158 = tpu.matmul %155, %156, %cst_40 {dimension_numbers = #tpu.dot_dimension_numbers<[1], [0], [0], [1], [0, 0, 1, 1], [], []>} : vector<2x100xf32>, vector<100x16xf32>, vector<2x16xf32> -> vector<2x16xf32>
    %159 = vector.broadcast %157 : vector<1x16xf32> to vector<2x16xf32>
    %160 = arith.addf %158, %159 : vector<2x16xf32>
    %161 = tpu.iota {dimensions = array<i32: 1>} : vector<2x16xi32>
    %c8_i32 = arith.constant 8 : i32
    %162 = vector.broadcast %c8_i32 : i32 to vector<2x16xi32>
    %163 = arith.cmpi slt, %161, %162 : vector<2x16xi32>
    %cst_41 = arith.constant 2.000000e+01 : f32
    %164 = vector.broadcast %cst_41 : f32 to vector<2x16xf32>
    %165 = arith.cmpf ogt, %160, %164 : vector<2x16xf32>
    %cst_42 = arith.constant 2.000000e+01 : f32
    %166 = vector.broadcast %cst_42 : f32 to vector<2x16xf32>
    %167 = arith.minimumf %160, %166 : vector<2x16xf32>
    %168 = math.exp %167 : vector<2x16xf32>
    %169 = math.log1p %168 : vector<2x16xf32>
    %170 = arith.select %165, %160, %169 : vector<2x16xi1>, vector<2x16xf32>
    %171 = arith.select %163, %160, %170 : vector<2x16xi1>, vector<2x16xf32>
    %c0_43 = arith.constant 0 : index
    %c0_44 = arith.constant 0 : index
    %172 = vector.load %arg2[%c0_43, %c0_44] : memref<2x16xf32, #tpu.memory_space<vmem>>, vector<2x16xf32>
    tpu.vector_store %arg2[%c0_43, %c0_44], %171 {strides = array<i32>} : memref<2x16xf32, #tpu.memory_space<vmem>>, vector<2x16xf32>,
    return
  }
}

</mosaic_0001>

<llo_original>
// kernel: forward.1
$region0: #{forward.1}
  #allocation0 [shape = 'u32[]', space=smem, size = 0x4, offset = 0x4, fixed_abs, tag = 'smem constant byte address 0x4 - core index']
  #allocation1 [shape = 'u32[144,128]{1,0:T(1,128)}', space=vmem, size = 0x12000, scoped, tag = 'internal scratch']
  %s0 = inlined_call_operand.vmem [shape: f32[32,12], index: 0, kind: input, shape index: {}]
  %s1 = inlined_call_operand.hbm [shape: f32[193,128], index: 1, kind: input, shape index: {}]
  %s2 = inlined_call_operand.vmem [shape: f32[2,16], index: 2, kind: output, shape index: {}]
  %s3 = sld [smem:[#allocation0]]
  $region22: #{forward.1} parent=0
    _
  %s5 = ssub.s32 1, %s3
  %s6 = scalar_select 0, %s5, %s3
  $region1: #{forward.1} parent=0
    #allocation2 [shape = 'u8[102400]{0}', space=vmem, size = 0x19000, scoped, tag = 'input window, operand 1, single buffered']
    #allocation3 [shape = 's32[1]{0}', space=sflag, size = 0x4, scoped, tag = 'scoped memory for forward.1']
    %7 = vsyncpa [#allocation3], 0
    // Predicated region
    $region2: #{forward.1} parent=1 // pred_check
      _
    $region3: #{forward.1} parent=1 // pred_check_branch
      %9 = sbr.rel (0) target = $region5
    $region4: #{forward.1} parent=1 // pred_region
      _
    $region5: #{forward.1} parent=1 // pred_fallthru
      _
    // Predicated region
    $region6: #{forward.1} parent=1 // pred_check
      _
    $region7: #{forward.1} parent=1 // pred_check_branch
      %11 = sbr.rel (0) target = $region9
    $region8: #{forward.1} parent=1 // pred_region
      %s13 = ssub.s32 3200, 3200
      %14 = vsyncadd [#allocation3], %s13
      %s15 = sshll.u32 [#allocation2], 4
      %s16 = int_to_ptr.vmem [resolvable:$true] %s15
      %21 = dma.hbm_to_vmem [thread:$0]  %s1, 3200, %s16, [#allocation3], 128, 128, 8
    $region9: #{forward.1} parent=1 // pred_fallthru
      _
    // Predicated region
    $region10: #{forward.1} parent=1 // pred_check
      _
    $region11: #{forward.1} parent=1 // pred_check_branch
      %23 = sbr.rel (0) target = $region13
    $region12: #{forward.1} parent=1 // pred_region
      %24 = dma.done [#allocation3], 3200
    $region13: #{forward.1} parent=1 // pred_fallthru
      _
    %v25 = vld [vmem:[%s0] sm:$0xff]
    %v26 = vld [vmem:[%s0 + $0x8] sm:$0xff]
    %v27 = vld [vmem:[%s0 + $0x10] sm:$0xff]
    %v28 = vld [vmem:[%s0 + $0x18] sm:$0xff]
    %vm31 = vcmask 1046528
    %v32 = vrot.slane %v27, 1
    %v33 = vrot.slane %v28, 1
    %v34 = vsel %vm31, %v32, %v33
    %v38 = vsel %vm31, %v26, %v32
    %v41 = vrot.slane %v25, 1
    %v42 = vrot.slane %v26, 1
    %v43 = vsel %vm31, %v41, %v42
    %vm45 = vcmask 1045504
    %v46 = vrot.slane %v27, 2
    %v47 = vrot.slane %v28, 2
    %v48 = vsel %vm45, %v46, %v47
    %v50 = vsel %vm31, %v42, %v46
    %52 = vrot.lane.b32.xlu0 %v43, 12
    %v53 = vpop.permute.xlu0 %52
    %54 = vrot.lane.b32.xlu0 %v50, 12
    %v55 = vpop.permute.xlu0 %54
    %56 = vrot.lane.b32.xlu0 %v48, 12
    %v57 = vpop.permute.xlu0 %56
    %58 = vrot.lane.b32.xlu0 %v47, 12
    %v59 = vpop.permute.xlu0 %58
    %vm64 = vcmask 97280
    %v65 = vsel %vm64, %v25, %v53
    %v66 = vsel %vm64, %v38, %v55
    %v67 = vsel %vm64, %v34, %v57
    %v68 = vsel %vm64, %v33, %v59
    %v69 = vld [vmem:[#allocation2] sm:$0xff]
    %v70 = vld [vmem:[#allocation2 + $0x8] sm:$0xff]
    %v71 = vld [vmem:[#allocation2 + $0x10] sm:$0xff]
    %v72 = vld [vmem:[#allocation2 + $0x2a] sm:$0x1]
    %v73 = vld [vmem:[#allocation2 + $0x2b] sm:$0x1]
    %v74 = vld [vmem:[#allocation2 + $0x2c] sm:$0x1]
    %v75 = vlaneseq
    %v76 = vshrl.u32 %v75, 7
    %v77 = vsub.s32 0, %v76
    %v78 = vrot.slane %v72, %v77
    %vm79 = vcmask 195584
    %v81 = vsel %vm79, %v65, 0
    %v84 = vsel %vm79, %v66, 0
    %v87 = vsel %vm79, %v67, 0
    %v90 = vsel %vm79, %v68, 0
    %92 = vmatprep.subr.mxu0 0.0
    %93 = vmatpush1.msra.mxu0 0.0
    %94 = vmatprep.subr.mxu0 0.0
    %95 = vmatpush1.msra.mxu0 0.0
    %96 = vmatprep.subr.mxu0 0.0
    %97 = vmatpush1.msra.mxu0 0.0
    %98 = vmatprep.subr.mxu0 0.0
    %99 = vmatpush1.msra.mxu0 0.0
    %100 = vmatprep.subr.mxu0 0.0
    %101 = vmatpush1.msra.mxu0 0.0
    %102 = vmatprep.subr.mxu0 0.0
    %103 = vmatpush1.msra.mxu0 0.0
    %104 = vmatprep.subr.mxu0 0.0
    %105 = vmatpush1.msra.mxu0 0.0
    %106 = vmatprep.subr.mxu0 0.0
    %107 = vmatpush1.msra.mxu0 0.0
    %108 = vmatprep.subr.mxu0 0.0
    %109 = vmatpush1.msra.mxu0 0.0
    %110 = vmatprep.subr.mxu0 0.0
    %111 = vmatpush1.msra.mxu0 0.0
    %112 = vmatprep.subr.mxu0 0.0
    %113 = vmatpush1.msra.mxu0 0.0
    %114 = vmatprep.subr.mxu0 0.0
    %115 = vmatpush1.msra.mxu0 0.0
    %116 = vmatprep.subr.mxu0 0.0
    %117 = vmatpush1.msra.mxu0 0.0
    %118 = vmatprep.subr.mxu0 0.0
    %119 = vmatpush1.msra.mxu0 %v71
    %120 = vmatprep.subr.mxu0 0.0
    %121 = vmatpush1.msra.mxu0 %v70
    %122 = vmatprep.subr.mxu0 0.0
    %123 = vmatpush1.msra.mxu0 %v69
    %124 = vmatprep.subr.mxu0 0.0
    %125 = vmatpush2.msra.mxu0 0.0
    %126 = vmatprep.subr.mxu0 0.0
    %127 = vmatpush2.msra.mxu0 0.0
    %128 = vmatprep.subr.mxu0 0.0
    %129 = vmatpush2.msra.mxu0 0.0
    %130 = vmatprep.subr.mxu0 0.0
    %131 = vmatpush2.msra.mxu0 0.0
    %132 = vmatprep.subr.mxu0 0.0
    %133 = vmatpush2.msra.mxu0 0.0
    %134 = vmatprep.subr.mxu0 0.0
    %135 = vmatpush2.msra.mxu0 0.0
    %136 = vmatprep.subr.mxu0 0.0
    %137 = vmatpush2.msra.mxu0 0.0
    %138 = vmatprep.subr.mxu0 0.0
    %139 = vmatpush2.msra.mxu0 0.0
    %140 = vmatprep.subr.mxu0 0.0
    %141 = vmatpush2.msra.mxu0 0.0
    %142 = vmatprep.subr.mxu0 0.0
    %143 = vmatpush2.msra.mxu0 0.0
    %144 = vmatprep.subr.mxu0 0.0
    %145 = vmatpush2.msra.mxu0 0.0
    %146 = vmatprep.subr.mxu0 0.0
    %147 = vmatpush2.msra.mxu0 0.0
    %148 = vmatprep.subr.mxu0 0.0
    %149 = vmatpush2.msra.mxu0 0.0
    %150 = vmatprep.subr.mxu0 0.0
    %151 = vmatpush2.msra.mxu0 0.0
    %152 = vmatprep.subr.mxu0 0.0
    %153 = vmatpush2.msra.mxu0 0.0
    %154 = vmatprep.subr.mxu0 0.0
    %155 = vmatpush2.msra.mxu0 0.0
    %156 = vmatprep.mubr.f32.mxu0 0.0
    %157 = vmatmul.mubr.f32.gmra.mxu0 %v81
    %v158 = vpop.f32.mrf.mxu0
    %v159 = vadd.f32 %v78, %v158
    %v160 = vpop.f32.mrf.mxu0
    %161 = vmatprep.mubr.f32.mxu0 0.0
    %162 = vmatmul.mubr.f32.gmra.mxu0 %v84
    %v163 = vpop.f32.mrf.mxu0
    %v164 = vadd.f32 %v78, %v163
    %v165 = vpop.f32.mrf.mxu0
    %166 = vmatprep.mubr.f32.mxu0 0.0
    %167 = vmatmul.mubr.f32.gmra.mxu0 %v87
    %v168 = vpop.f32.mrf.mxu0
    %v169 = vadd.f32 %v78, %v168
    %v170 = vpop.f32.mrf.mxu0
    %171 = vmatprep.mubr.f32.mxu0 0.0
    %172 = vmatmul.mubr.f32.gmra.mxu0 %v90
    %v173 = vpop.f32.mrf.mxu0
    %v174 = vadd.f32 %v78, %v173
    %v175 = vpop.f32.mrf.mxu0
    %176 = vdwg.mxu0
    %v177 = vmax.f32 %v159, 0.0
    %v178 = vmax.f32 %v164, 0.0
    %v179 = vmax.f32 %v169, 0.0
    %v180 = vmax.f32 %v174, 0.0
    %vm181 = vcmask 15360
    %v182 = vsel %vm181, %v177, 0.0
    %v183 = vsel %vm181, %v178, 0.0
    %v184 = vadd.f32 %v182, %v183
    %v185 = vsel %vm181, %v179, 0.0
    %v186 = vadd.f32 %v184, %v185
    %vm187 = vcmask 13312
    %v188 = vsel %vm187, %v180, 0.0
    %v189 = vadd.f32 %v186, %v188
    %v190 = vrot.slane %v189, 4
    %v191 = vadd.f32 %v189, %v190
    %v192 = vrot.slane %v191, 2
    %v193 = vadd.f32 %v191, %v192
    %v194 = vrot.slane %v193, 1
    %v195 = vadd.f32 %v193, %v194
    %v196 = vrcp.pop 30.0
    %v197 = vmul.f32 %v195, %v196
    %v198 = vsub.f32 %v177, %v197
    %v199 = vsub.f32 %v178, %v197
    %v200 = vsub.f32 %v179, %v197
    %v201 = vsub.f32 %v180, %v197
    %v202 = vmul.f32 %v198, %v198
    %v203 = vmul.f32 %v199, %v199
    %v204 = vmul.f32 %v200, %v200
    %v205 = vmul.f32 %v201, %v201
    %v206 = vsel %vm181, %v202, 0.0
    %v207 = vsel %vm181, %v203, 0.0
    %v208 = vadd.f32 %v206, %v207
    %v209 = vsel %vm181, %v204, 0.0
    %v210 = vadd.f32 %v208, %v209
    %v211 = vsel %vm187, %v205, 0.0
    %v212 = vadd.f32 %v210, %v211
    %v213 = vrot.slane %v212, 4
    %v214 = vadd.f32 %v212, %v213
    %v215 = vrot.slane %v214, 2
    %v216 = vadd.f32 %v214, %v215
    %v217 = vrot.slane %v216, 1
    %v218 = vadd.f32 %v216, %v217
    %v219 = vmul.f32 %v218, %v196
    %v220 = vadd.f32 %v219, 1e-05
    %v221 = vrsqrt.pop %v220
    %v222 = vmul.f32 %v198, %v221
    %v223 = vmul.f32 %v199, %v221
    %v224 = vmul.f32 %v200, %v221
    %v225 = vmul.f32 %v201, %v221
    %v226 = vlaneseq
    %v227 = vshrl.u32 %v226, 7
    %v228 = vsub.s32 0, %v227
    %v229 = vrot.slane %v73, %v228
    %v230 = vmul.f32 %v222, %v229
    %v231 = vmul.f32 %v223, %v229
    %v232 = vmul.f32 %v224, %v229
    %v233 = vmul.f32 %v225, %v229
    %v234 = vlaneseq
    %v235 = vshrl.u32 %v234, 7
    %v236 = vsub.s32 0, %v235
    %v237 = vrot.slane %v74, %v236
    %v238 = vadd.f32 %v230, %v237
    %v239 = vadd.f32 %v231, %v237
    %v240 = vadd.f32 %v232, %v237
    %v241 = vadd.f32 %v233, %v237
    %v245 = vrot.slane %v239, 2
    %v246 = vrot.slane %v240, 2
    %v247 = vsel %vm45, %v245, %v246
    %v248 = vrot.slane %v241, 2
    %v249 = vsel %vm45, %v246, %v248
    %vm253 = vcmask 1044480
    %v254 = vsel %vm253, %v239, %v247
    %v256 = vrot.slane %v238, 1
    %v257 = vrot.slane %v239, 1
    %v258 = vsel %vm31, %v256, %v257
    %v260 = vrot.slane %v240, 3
    %v261 = vrot.slane %v241, 3
    %v262 = vsel %vm253, %v260, %v261
    %v264 = vsel %vm253, %v257, %v260
    %v265 = vrot.slane %v238, 2
    %v266 = vsel %vm45, %v265, %v245
    %vm268 = vcmask 1043456
    %v269 = vrot.slane %v240, 4
    %v270 = vrot.slane %v241, 4
    %v271 = vsel %vm268, %v269, %v270
    %v273 = vsel %vm253, %v245, %v269
    %275 = vrot.lane.b32.xlu0 %v258, 2
    %v276 = vpop.permute.xlu0 %275
    %277 = vrot.lane.b32.xlu0 %v264, 2
    %v278 = vpop.permute.xlu0 %277
    %279 = vrot.lane.b32.xlu0 %v262, 2
    %v280 = vpop.permute.xlu0 %279
    %281 = vrot.lane.b32.xlu0 %v261, 2
    %v282 = vpop.permute.xlu0 %281
    %288 = vrot.lane.b32.xlu0 %v266, 4
    %v289 = vpop.permute.xlu0 %288
    %290 = vrot.lane.b32.xlu0 %v273, 4
    %v291 = vpop.permute.xlu0 %290
    %292 = vrot.lane.b32.xlu0 %v271, 4
    %v293 = vpop.permute.xlu0 %292
    %294 = vrot.lane.b32.xlu0 %v270, 4
    %v295 = vpop.permute.xlu0 %294
    %v300 = vsel %vm181, %v238, %v276
    %v301 = vsel %vm181, %v254, %v278
    %v302 = vsel %vm181, %v249, %v280
    %v303 = vsel %vm181, %v248, %v282
    %vm304 = vcmask 31744
    %v305 = vsel %vm304, %v300, %v289
    %v306 = vsel %vm304, %v301, %v291
    %v307 = vsel %vm304, %v302, %v293
    %v308 = vsel %vm304, %v303, %v295
    %v309 = vld [vmem:[#allocation2 + $0x18] sm:$0x3f]
    %v310 = vld [vmem:[#allocation2 + $0x2d] sm:$0x1]
    %v311 = vld [vmem:[#allocation2 + $0x2e] sm:$0x1]
    %v312 = vld [vmem:[#allocation2 + $0x2f] sm:$0x1]
    %v313 = vlaneseq
    %v314 = vshrl.u32 %v313, 7
    %v315 = vsub.s32 0, %v314
    %v316 = vrot.slane %v310, %v315
    %vm317 = vcmask 48128
    %v319 = vsel %vm317, %v305, 0
    %v322 = vsel %vm317, %v306, 0
    %v325 = vsel %vm317, %v307, 0
    %v328 = vsel %vm317, %v308, 0
    %v331 = vsel %vm45, %v309, 0
    %333 = vmatprep.subr.mxu0 0.0
    %334 = vmatpush1.msra.mxu0 0.0
    %335 = vmatprep.subr.mxu0 0.0
    %336 = vmatpush1.msra.mxu0 0.0
    %337 = vmatprep.subr.mxu0 0.0
    %338 = vmatpush1.msra.mxu0 0.0
    %339 = vmatprep.subr.mxu0 0.0
    %340 = vmatpush1.msra.mxu0 0.0
    %341 = vmatprep.subr.mxu0 0.0
    %342 = vmatpush1.msra.mxu0 0.0
    %343 = vmatprep.subr.mxu0 0.0
    %344 = vmatpush1.msra.mxu0 0.0
    %345 = vmatprep.subr.mxu0 0.0
    %346 = vmatpush1.msra.mxu0 0.0
    %347 = vmatprep.subr.mxu0 0.0
    %348 = vmatpush1.msra.mxu0 0.0
    %349 = vmatprep.subr.mxu0 0.0
    %350 = vmatpush1.msra.mxu0 0.0
    %351 = vmatprep.subr.mxu0 0.0
    %352 = vmatpush1.msra.mxu0 0.0
    %353 = vmatprep.subr.mxu0 0.0
    %354 = vmatpush1.msra.mxu0 0.0
    %355 = vmatprep.subr.mxu0 0.0
    %356 = vmatpush1.msra.mxu0 0.0
    %357 = vmatprep.subr.mxu0 0.0
    %358 = vmatpush1.msra.mxu0 0.0
    %359 = vmatprep.subr.mxu0 0.0
    %360 = vmatpush1.msra.mxu0 0.0
    %361 = vmatprep.subr.mxu0 0.0
    %362 = vmatpush1.msra.mxu0 0.0
    %363 = vmatprep.subr.mxu0 0.0
    %364 = vmatpush1.msra.mxu0 %v331
    %365 = vmatprep.subr.mxu0 0.0
    %366 = vmatpush2.msra.mxu0 0.0
    %367 = vmatprep.subr.mxu0 0.0
    %368 = vmatpush2.msra.mxu0 0.0
    %369 = vmatprep.subr.mxu0 0.0
    %370 = vmatpush2.msra.mxu0 0.0
    %371 = vmatprep.subr.mxu0 0.0
    %372 = vmatpush2.msra.mxu0 0.0
    %373 = vmatprep.subr.mxu0 0.0
    %374 = vmatpush2.msra.mxu0 0.0
    %375 = vmatprep.subr.mxu0 0.0
    %376 = vmatpush2.msra.mxu0 0.0
    %377 = vmatprep.subr.mxu0 0.0
    %378 = vmatpush2.msra.mxu0 0.0
    %379 = vmatprep.subr.mxu0 0.0
    %380 = vmatpush2.msra.mxu0 0.0
    %381 = vmatprep.subr.mxu0 0.0
    %382 = vmatpush2.msra.mxu0 0.0
    %383 = vmatprep.subr.mxu0 0.0
    %384 = vmatpush2.msra.mxu0 0.0
    %385 = vmatprep.subr.mxu0 0.0
    %386 = vmatpush2.msra.mxu0 0.0
    %387 = vmatprep.subr.mxu0 0.0
    %388 = vmatpush2.msra.mxu0 0.0
    %389 = vmatprep.subr.mxu0 0.0
    %390 = vmatpush2.msra.mxu0 0.0
    %391 = vmatprep.subr.mxu0 0.0
    %392 = vmatpush2.msra.mxu0 0.0
    %393 = vmatprep.subr.mxu0 0.0
    %394 = vmatpush2.msra.mxu0 0.0
    %395 = vmatprep.subr.mxu0 0.0
    %396 = vmatpush2.msra.mxu0 0.0
    %397 = vmatprep.mubr.f32.mxu0 0.0
    %398 = vmatmul.mubr.f32.gmra.mxu0 %v319
    %v399 = vpop.f32.mrf.mxu0
    %v400 = vadd.f32 %v316, %v399
    %v401 = vpop.f32.mrf.mxu0
    %402 = vmatprep.mubr.f32.mxu0 0.0
    %403 = vmatmul.mubr.f32.gmra.mxu0 %v322
    %v404 = vpop.f32.mrf.mxu0
    %v405 = vadd.f32 %v316, %v404
    %v406 = vpop.f32.mrf.mxu0
    %407 = vmatprep.mubr.f32.mxu0 0.0
    %408 = vmatmul.mubr.f32.gmra.mxu0 %v325
    %v409 = vpop.f32.mrf.mxu0
    %v410 = vadd.f32 %v316, %v409
    %v411 = vpop.f32.mrf.mxu0
    %412 = vmatprep.mubr.f32.mxu0 0.0
    %413 = vmatmul.mubr.f32.gmra.mxu0 %v328
    %v414 = vpop.f32.mrf.mxu0
    %v415 = vadd.f32 %v316, %v414
    %v416 = vpop.f32.mrf.mxu0
    %417 = vdwg.mxu0
    %v418 = vmax.f32 %v400, 0.0
    %v419 = vmax.f32 %v405, 0.0
    %v420 = vmax.f32 %v410, 0.0
    %v421 = vmax.f32 %v415, 0.0
    %vm422 = vcmask 23552
    %v423 = vsel %vm422, %v418, 0.0
    %v424 = vsel %vm422, %v419, 0.0
    %v425 = vadd.f32 %v423, %v424
    %v426 = vsel %vm422, %v420, 0.0
    %v427 = vadd.f32 %v425, %v426
    %vm428 = vcmask 17408
    %v429 = vsel %vm428, %v421, 0.0
    %v430 = vadd.f32 %v427, %v429
    %v431 = vrot.slane %v430, 4
    %v432 = vadd.f32 %v430, %v431
    %v433 = vrot.slane %v432, 2
    %v434 = vadd.f32 %v432, %v433
    %v435 = vrot.slane %v434, 1
    %v436 = vadd.f32 %v434, %v435
    %v437 = vrcp.pop 26.0
    %v438 = vmul.f32 %v436, %v437
    %v439 = vsub.f32 %v418, %v438
    %v440 = vsub.f32 %v419, %v438
    %v441 = vsub.f32 %v420, %v438
    %v442 = vsub.f32 %v421, %v438
    %v443 = vmul.f32 %v439, %v439
    %v444 = vmul.f32 %v440, %v440
    %v445 = vmul.f32 %v441, %v441
    %v446 = vmul.f32 %v442, %v442
    %v447 = vsel %vm422, %v443, 0.0
    %v448 = vsel %vm422, %v444, 0.0
    %v449 = vadd.f32 %v447, %v448
    %v450 = vsel %vm422, %v445, 0.0
    %v451 = vadd.f32 %v449, %v450
    %v452 = vsel %vm428, %v446, 0.0
    %v453 = vadd.f32 %v451, %v452
    %v454 = vrot.slane %v453, 4
    %v455 = vadd.f32 %v453, %v454
    %v456 = vrot.slane %v455, 2
    %v457 = vadd.f32 %v455, %v456
    %v458 = vrot.slane %v457, 1
    %v459 = vadd.f32 %v457, %v458
    %v460 = vmul.f32 %v459, %v437
    %v461 = vadd.f32 %v460, 1e-05
    %v462 = vrsqrt.pop %v461
    %v463 = vmul.f32 %v439, %v462
    %v464 = vmul.f32 %v440, %v462
    %v465 = vmul.f32 %v441, %v462
    %v466 = vmul.f32 %v442, %v462
    %v467 = vlaneseq
    %v468 = vshrl.u32 %v467, 7
    %v469 = vsub.s32 0, %v468
    %v470 = vrot.slane %v311, %v469
    %v471 = vmul.f32 %v463, %v470
    %v472 = vmul.f32 %v464, %v470
    %v473 = vmul.f32 %v465, %v470
    %v474 = vmul.f32 %v466, %v470
    %v475 = vlaneseq
    %v476 = vshrl.u32 %v475, 7
    %v477 = vsub.s32 0, %v476
    %v478 = vrot.slane %v312, %v477
    %v479 = vadd.f32 %v471, %v478
    %v480 = vadd.f32 %v472, %v478
    %v481 = vadd.f32 %v473, %v478
    %v482 = vadd.f32 %v474, %v478
    %v485 = vrot.slane %v480, 3
    %v486 = vrot.slane %v481, 3
    %v487 = vsel %vm253, %v485, %v486
    %vm490 = vcmask 1041408
    %v491 = vsel %vm490, %v480, %v487
    %v493 = vrot.slane %v479, 1
    %v494 = vrot.slane %v480, 1
    %v495 = vsel %vm31, %v493, %v494
    %v497 = vrot.slane %v480, 4
    %v498 = vrot.slane %v481, 4
    %v499 = vsel %vm268, %v497, %v498
    %v501 = vsel %vm490, %v494, %v499
    %v502 = vrot.slane %v479, 2
    %v503 = vrot.slane %v480, 2
    %v504 = vsel %vm45, %v502, %v503
    %vm507 = vcmask 1042432
    %v508 = vrot.slane %v480, 5
    %v509 = vrot.slane %v481, 5
    %v510 = vsel %vm507, %v508, %v509
    %v511 = vrot.slane %v482, 5
    %v512 = vsel %vm507, %v509, %v511
    %v514 = vsel %vm490, %v503, %v510
    %v515 = vrot.slane %v479, 3
    %v516 = vsel %vm253, %v515, %v485
    %v518 = vrot.slane %v481, 6
    %v519 = vrot.slane %v482, 6
    %v520 = vsel %vm490, %v518, %v519
    %v522 = vsel %vm490, %v485, %v518
    %524 = vrot.lane.b32.xlu0 %v495, 3
    %v525 = vpop.permute.xlu0 %524
    %526 = vrot.lane.b32.xlu0 %v501, 3
    %v527 = vpop.permute.xlu0 %526
    %528 = vrot.lane.b32.xlu0 %v498, 3
    %v529 = vpop.permute.xlu0 %528
    %534 = vrot.lane.b32.xlu0 %v504, 6
    %v535 = vpop.permute.xlu0 %534
    %536 = vrot.lane.b32.xlu0 %v514, 6
    %v537 = vpop.permute.xlu0 %536
    %538 = vrot.lane.b32.xlu0 %v512, 6
    %v539 = vpop.permute.xlu0 %538
    %544 = vrot.lane.b32.xlu0 %v516, 9
    %v545 = vpop.permute.xlu0 %544
    %546 = vrot.lane.b32.xlu0 %v522, 9
    %v547 = vpop.permute.xlu0 %546
    %548 = vrot.lane.b32.xlu0 %v520, 9
    %v549 = vpop.permute.xlu0 %548
    %v553 = vsel %vm422, %v479, %v525
    %v554 = vsel %vm422, %v491, %v527
    %v555 = vsel %vm422, %v486, %v529
    %v556 = vsel %vm317, %v553, %v535
    %v557 = vsel %vm317, %v554, %v537
    %v558 = vsel %vm317, %v555, %v539
    %vm559 = vcmask 72704
    %v560 = vsel %vm559, %v556, %v545
    %v561 = vsel %vm559, %v557, %v547
    %v562 = vsel %vm559, %v558, %v549
    %v563 = vld [vmem:[#allocation2 + $0x1e] sm:$0xff]
    %v564 = vld [vmem:[#allocation2 + $0x26] sm:$0xf]
    %v565 = vld [vmem:[#allocation2 + $0x30] sm:$0x1]
    %v566 = vld [vmem:[#allocation2 + $0x31] sm:$0x1]
    %v567 = vld [vmem:[#allocation2 + $0x32] sm:$0x1]
    %v568 = vlaneseq
    %v569 = vshrl.u32 %v568, 7
    %v570 = vsub.s32 0, %v569
    %v571 = vrot.slane %v565, %v570
    %v573 = vsel %vm64, %v560, 0
    %v576 = vsel %vm64, %v561, 0
    %v579 = vsel %vm64, %v562, 0
    %v582 = vsel %vm268, %v564, 0
    %584 = vmatprep.subr.mxu0 0.0
    %585 = vmatpush1.msra.mxu0 0.0
    %586 = vmatprep.subr.mxu0 0.0
    %587 = vmatpush1.msra.mxu0 0.0
    %588 = vmatprep.subr.mxu0 0.0
    %589 = vmatpush1.msra.mxu0 0.0
    %590 = vmatprep.subr.mxu0 0.0
    %591 = vmatpush1.msra.mxu0 0.0
    %592 = vmatprep.subr.mxu0 0.0
    %593 = vmatpush1.msra.mxu0 0.0
    %594 = vmatprep.subr.mxu0 0.0
    %595 = vmatpush1.msra.mxu0 0.0
    %596 = vmatprep.subr.mxu0 0.0
    %597 = vmatpush1.msra.mxu0 0.0
    %598 = vmatprep.subr.mxu0 0.0
    %599 = vmatpush1.msra.mxu0 0.0
    %600 = vmatprep.subr.mxu0 0.0
    %601 = vmatpush1.msra.mxu0 0.0
    %602 = vmatprep.subr.mxu0 0.0
    %603 = vmatpush1.msra.mxu0 0.0
    %604 = vmatprep.subr.mxu0 0.0
    %605 = vmatpush1.msra.mxu0 0.0
    %606 = vmatprep.subr.mxu0 0.0
    %607 = vmatpush1.msra.mxu0 0.0
    %608 = vmatprep.subr.mxu0 0.0
    %609 = vmatpush1.msra.mxu0 0.0
    %610 = vmatprep.subr.mxu0 0.0
    %611 = vmatpush1.msra.mxu0 0.0
    %612 = vmatprep.subr.mxu0 0.0
    %613 = vmatpush1.msra.mxu0 %v582
    %614 = vmatprep.subr.mxu0 0.0
    %615 = vmatpush1.msra.mxu0 %v563
    %616 = vmatprep.subr.mxu0 0.0
    %617 = vmatpush2.msra.mxu0 0.0
    %618 = vmatprep.subr.mxu0 0.0
    %619 = vmatpush2.msra.mxu0 0.0
    %620 = vmatprep.subr.mxu0 0.0
    %621 = vmatpush2.msra.mxu0 0.0
    %622 = vmatprep.subr.mxu0 0.0
    %623 = vmatpush2.msra.mxu0 0.0
    %624 = vmatprep.subr.mxu0 0.0
    %625 = vmatpush2.msra.mxu0 0.0
    %626 = vmatprep.subr.mxu0 0.0
    %627 = vmatpush2.msra.mxu0 0.0
    %628 = vmatprep.subr.mxu0 0.0
    %629 = vmatpush2.msra.mxu0 0.0
    %630 = vmatprep.subr.mxu0 0.0
    %631 = vmatpush2.msra.mxu0 0.0
    %632 = vmatprep.subr.mxu0 0.0
    %633 = vmatpush2.msra.mxu0 0.0
    %634 = vmatprep.subr.mxu0 0.0
    %635 = vmatpush2.msra.mxu0 0.0
    %636 = vmatprep.subr.mxu0 0.0
    %637 = vmatpush2.msra.mxu0 0.0
    %638 = vmatprep.subr.mxu0 0.0
    %639 = vmatpush2.msra.mxu0 0.0
    %640 = vmatprep.subr.mxu0 0.0
    %641 = vmatpush2.msra.mxu0 0.0
    %642 = vmatprep.subr.mxu0 0.0
    %643 = vmatpush2.msra.mxu0 0.0
    %644 = vmatprep.subr.mxu0 0.0
    %645 = vmatpush2.msra.mxu0 0.0
    %646 = vmatprep.subr.mxu0 0.0
    %647 = vmatpush2.msra.mxu0 0.0
    %648 = vmatprep.mubr.f32.mxu0 0.0
    %649 = vmatmul.mubr.f32.gmra.mxu0 %v573
    %v650 = vpop.f32.mrf.mxu0
    %v651 = vadd.f32 %v571, %v650
    %v652 = vpop.f32.mrf.mxu0
    %653 = vmatprep.mubr.f32.mxu0 0.0
    %654 = vmatmul.mubr.f32.gmra.mxu0 %v576
    %v655 = vpop.f32.mrf.mxu0
    %v656 = vadd.f32 %v571, %v655
    %v657 = vpop.f32.mrf.mxu0
    %658 = vmatprep.mubr.f32.mxu0 0.0
    %659 = vmatmul.mubr.f32.gmra.mxu0 %v579
    %v660 = vpop.f32.mrf.mxu0
    %v661 = vadd.f32 %v571, %v660
    %v662 = vpop.f32.mrf.mxu0
    %663 = vdwg.mxu0
    %v664 = vmax.f32 %v651, 0.0
    %v665 = vmax.f32 %v656, 0.0
    %v666 = vmax.f32 %v661, 0.0
    %v667 = vsel %vm304, %v664, 0.0
    %v668 = vsel %vm304, %v665, 0.0
    %v669 = vadd.f32 %v667, %v668
    %vm670 = vcmask 27648
    %v671 = vsel %vm670, %v666, 0.0
    %v672 = vadd.f32 %v669, %v671
    %v673 = vrot.slane %v672, 4
    %v674 = vadd.f32 %v672, %v673
    %v675 = vrot.slane %v674, 2
    %v676 = vadd.f32 %v674, %v675
    %v677 = vrot.slane %v676, 1
    %v678 = vadd.f32 %v676, %v677
    %v679 = vrcp.pop 20.0
    %v680 = vmul.f32 %v678, %v679
    %v681 = vsub.f32 %v664, %v680
    %v682 = vsub.f32 %v665, %v680
    %v683 = vsub.f32 %v666, %v680
    %v684 = vmul.f32 %v681, %v681
    %v685 = vmul.f32 %v682, %v682
    %v686 = vmul.f32 %v683, %v683
    %v687 = vsel %vm304, %v684, 0.0
    %v688 = vsel %vm304, %v685, 0.0
    %v689 = vadd.f32 %v687, %v688
    %v690 = vsel %vm670, %v686, 0.0
    %v691 = vadd.f32 %v689, %v690
    %v692 = vrot.slane %v691, 4
    %v693 = vadd.f32 %v691, %v692
    %v694 = vrot.slane %v693, 2
    %v695 = vadd.f32 %v693, %v694
    %v696 = vrot.slane %v695, 1
    %v697 = vadd.f32 %v695, %v696
    %v698 = vmul.f32 %v697, %v679
    %v699 = vadd.f32 %v698, 1e-05
    %v700 = vrsqrt.pop %v699
    %v701 = vmul.f32 %v681, %v700
    %v702 = vmul.f32 %v682, %v700
    %v703 = vmul.f32 %v683, %v700
    %v704 = vlaneseq
    %v705 = vshrl.u32 %v704, 7
    %v706 = vsub.s32 0, %v705
    %v707 = vrot.slane %v566, %v706
    %v708 = vmul.f32 %v701, %v707
    %v709 = vmul.f32 %v702, %v707
    %v710 = vmul.f32 %v703, %v707
    %v711 = vlaneseq
    %v712 = vshrl.u32 %v711, 7
    %v713 = vsub.s32 0, %v712
    %v714 = vrot.slane %v567, %v713
    %v715 = vadd.f32 %v708, %v714
    %v716 = vadd.f32 %v709, %v714
    %v717 = vadd.f32 %v710, %v714
    %v719 = vrot.slane %v716, 1
    %vm721 = vcmask 1040384
    %v722 = vsel %vm721, %v715, %v719
    %v724 = vrot.slane %v715, 1
    %v726 = vrot.slane %v716, 2
    %v728 = vsel %vm721, %v724, %v726
    %v729 = vrot.slane %v715, 2
    %v731 = vrot.slane %v716, 3
    %v733 = vsel %vm721, %v729, %v731
    %v734 = vrot.slane %v715, 3
    %v736 = vrot.slane %v716, 4
    %v738 = vsel %vm721, %v734, %v736
    %v739 = vrot.slane %v715, 4
    %v741 = vrot.slane %v716, 5
    %v743 = vsel %vm721, %v739, %v741
    %v744 = vrot.slane %v715, 5
    %v746 = vrot.slane %v716, 6
    %v748 = vsel %vm721, %v744, %v746
    %v749 = vrot.slane %v715, 6
    %v752 = vrot.slane %v717, 7
    %v754 = vsel %vm721, %v749, %v752
    %v755 = vrot.slane %v715, 7
    %v757 = vsel %vm721, %v755, %v717
    %v758 = vrot.slane %v717, 1
    %v760 = vsel %vm721, %v716, %v758
    %v761 = vrot.slane %v717, 2
    %v763 = vsel %vm721, %v719, %v761
    %765 = vrot.lane.b32.xlu0 %v728, 4
    %v766 = vpop.permute.xlu0 %765
    %769 = vrot.lane.b32.xlu0 %v733, 8
    %v770 = vpop.permute.xlu0 %769
    %773 = vrot.lane.b32.xlu0 %v738, 12
    %v774 = vpop.permute.xlu0 %773
    %777 = vrot.lane.b32.xlu0 %v743, 16
    %v778 = vpop.permute.xlu0 %777
    %781 = vrot.lane.b32.xlu0 %v748, 20
    %v782 = vpop.permute.xlu0 %781
    %785 = vrot.lane.b32.xlu0 %v754, 24
    %v786 = vpop.permute.xlu0 %785
    %789 = vrot.lane.b32.xlu0 %v757, 28
    %v790 = vpop.permute.xlu0 %789
    %793 = vrot.lane.b32.xlu0 %v760, 32
    %v794 = vpop.permute.xlu0 %793
    %797 = vrot.lane.b32.xlu0 %v763, 36
    %v798 = vpop.permute.xlu0 %797
    %v800 = vsel %vm304, %v722, %v766
    %vm801 = vcmask 64512
    %v802 = vsel %vm801, %v800, %v770
    %v803 = vsel %vm64, %v802, %v774
    %vm804 = vcmask 130048
    %v805 = vsel %vm804, %v803, %v778
    %vm806 = vcmask 162816
    %v807 = vsel %vm806, %v805, %v782
    %v808 = vsel %vm79, %v807, %v786
    %vm809 = vcmask 228352
    %v810 = vsel %vm809, %v808, %v790
    %vm811 = vcmask 261120
    %v812 = vsel %vm811, %v810, %v794
    %vm813 = vcmask 293888
    %v814 = vsel %vm813, %v812, %v798
    %v815 = vld [vmem:[#allocation2 + $0x33] sm:$0xff]
    %v816 = vld [vmem:[#allocation2 + $0x3b] sm:$0xff]
    %v817 = vld [vmem:[#allocation2 + $0x43] sm:$0xff]
    %v818 = vld [vmem:[#allocation2 + $0x4b] sm:$0xff]
    %v819 = vld [vmem:[#allocation2 + $0x53] sm:$0xff]
    %v820 = vld [vmem:[#allocation2 + $0x5b] sm:$0x1]
    %v821 = vlaneseq
    %v822 = vshrl.u32 %v821, 7
    %v823 = vsub.s32 0, %v822
    %v824 = vrot.slane %v820, %v823
    %vm825 = vcmask 326656
    %v827 = vsel %vm825, %v814, 0
    %829 = vmatprep.subr.mxu0 0.0
    %830 = vmatpush1.msra.mxu0 0.0
    %831 = vmatprep.subr.mxu0 0.0
    %832 = vmatpush1.msra.mxu0 0.0
    %833 = vmatprep.subr.mxu0 0.0
    %834 = vmatpush1.msra.mxu0 0.0
    %835 = vmatprep.subr.mxu0 0.0
    %836 = vmatpush1.msra.mxu0 0.0
    %837 = vmatprep.subr.mxu0 0.0
    %838 = vmatpush1.msra.mxu0 0.0
    %839 = vmatprep.subr.mxu0 0.0
    %840 = vmatpush1.msra.mxu0 0.0
    %841 = vmatprep.subr.mxu0 0.0
    %842 = vmatpush1.msra.mxu0 0.0
    %843 = vmatprep.subr.mxu0 0.0
    %844 = vmatpush1.msra.mxu0 0.0
    %845 = vmatprep.subr.mxu0 0.0
    %846 = vmatpush1.msra.mxu0 0.0
    %847 = vmatprep.subr.mxu0 0.0
    %848 = vmatpush1.msra.mxu0 0.0
    %849 = vmatprep.subr.mxu0 0.0
    %850 = vmatpush1.msra.mxu0 0.0
    %851 = vmatprep.subr.mxu0 0.0
    %852 = vmatpush1.msra.mxu0 %v819
    %853 = vmatprep.subr.mxu0 0.0
    %854 = vmatpush1.msra.mxu0 %v818
    %855 = vmatprep.subr.mxu0 0.0
    %856 = vmatpush1.msra.mxu0 %v817
    %857 = vmatprep.subr.mxu0 0.0
    %858 = vmatpush1.msra.mxu0 %v816
    %859 = vmatprep.subr.mxu0 0.0
    %860 = vmatpush1.msra.mxu0 %v815
    %861 = vmatprep.subr.mxu0 0.0
    %862 = vmatpush2.msra.mxu0 0.0
    %863 = vmatprep.subr.mxu0 0.0
    %864 = vmatpush2.msra.mxu0 0.0
    %865 = vmatprep.subr.mxu0 0.0
    %866 = vmatpush2.msra.mxu0 0.0
    %867 = vmatprep.subr.mxu0 0.0
    %868 = vmatpush2.msra.mxu0 0.0
    %869 = vmatprep.subr.mxu0 0.0
    %870 = vmatpush2.msra.mxu0 0.0
    %871 = vmatprep.subr.mxu0 0.0
    %872 = vmatpush2.msra.mxu0 0.0
    %873 = vmatprep.subr.mxu0 0.0
    %874 = vmatpush2.msra.mxu0 0.0
    %875 = vmatprep.subr.mxu0 0.0
    %876 = vmatpush2.msra.mxu0 0.0
    %877 = vmatprep.subr.mxu0 0.0
    %878 = vmatpush2.msra.mxu0 0.0
    %879 = vmatprep.subr.mxu0 0.0
    %880 = vmatpush2.msra.mxu0 0.0
    %881 = vmatprep.subr.mxu0 0.0
    %882 = vmatpush2.msra.mxu0 0.0
    %883 = vmatprep.subr.mxu0 0.0
    %884 = vmatpush2.msra.mxu0 0.0
    %885 = vmatprep.subr.mxu0 0.0
    %886 = vmatpush2.msra.mxu0 0.0
    %887 = vmatprep.subr.mxu0 0.0
    %888 = vmatpush2.msra.mxu0 0.0
    %889 = vmatprep.subr.mxu0 0.0
    %890 = vmatpush2.msra.mxu0 0.0
    %891 = vmatprep.subr.mxu0 0.0
    %892 = vmatpush2.msra.mxu0 0.0
    %893 = vmatprep.mubr.f32.mxu0 0.0
    %894 = vmatmul.mubr.f32.gmra.mxu0 %v827
    %v895 = vpop.f32.mrf.mxu0
    %v896 = vadd.f32 %v824, %v895
    %v897 = vpop.f32.mrf.mxu0
    %898 = vdwg.mxu0
    %v899 = vmax.f32 %v896, 0.0
    %v900 = vld [vmem:[#allocation2 + $0x5c] sm:$0xff]
    %v901 = vld [vmem:[#allocation2 + $0x64] sm:$0xff]
    %v902 = vld [vmem:[#allocation2 + $0x6c] sm:$0xff]
    %v903 = vld [vmem:[#allocation2 + $0x74] sm:$0xff]
    %v904 = vld [vmem:[#allocation2 + $0x7c] sm:$0xff]
    %v905 = vld [vmem:[#allocation2 + $0x84] sm:$0xff]
    %v906 = vld [vmem:[#allocation2 + $0x8c] sm:$0xff]
    %v907 = vld [vmem:[#allocation2 + $0x94] sm:$0xff]
    %v908 = vld [vmem:[#allocation2 + $0x9c] sm:$0xff]
    %v909 = vld [vmem:[#allocation2 + $0xa4] sm:$0xff]
    %v910 = vld [vmem:[#allocation2 + $0xac] sm:$0xff]
    %v911 = vld [vmem:[#allocation2 + $0xb4] sm:$0xff]
    %v912 = vld [vmem:[#allocation2 + $0xbc] sm:$0xf]
    %v913 = vld [vmem:[#allocation2 + $0xc0] sm:$0x1]
    %v914 = vlaneseq
    %v915 = vshrl.u32 %v914, 7
    %v916 = vsub.s32 0, %v915
    %v917 = vrot.slane %v913, %v916
    %vm918 = vcmask 818176
    %v920 = vsel %vm918, %v899, 0
    %v923 = vsel %vm268, %v912, 0
    %925 = vmatprep.subr.mxu0 0.0
    %926 = vmatpush1.msra.mxu0 0.0
    %927 = vmatprep.subr.mxu0 0.0
    %928 = vmatpush1.msra.mxu0 0.0
    %929 = vmatprep.subr.mxu0 0.0
    %930 = vmatpush1.msra.mxu0 0.0
    %931 = vmatprep.subr.mxu0 0.0
    %932 = vmatpush1.msra.mxu0 %v923
    %933 = vmatprep.subr.mxu0 0.0
    %934 = vmatpush1.msra.mxu0 %v911
    %935 = vmatprep.subr.mxu0 0.0
    %936 = vmatpush1.msra.mxu0 %v910
    %937 = vmatprep.subr.mxu0 0.0
    %938 = vmatpush1.msra.mxu0 %v909
    %939 = vmatprep.subr.mxu0 0.0
    %940 = vmatpush1.msra.mxu0 %v908
    %941 = vmatprep.subr.mxu0 0.0
    %942 = vmatpush1.msra.mxu0 %v907
    %943 = vmatprep.subr.mxu0 0.0
    %944 = vmatpush1.msra.mxu0 %v906
    %945 = vmatprep.subr.mxu0 0.0
    %946 = vmatpush1.msra.mxu0 %v905
    %947 = vmatprep.subr.mxu0 0.0
    %948 = vmatpush1.msra.mxu0 %v904
    %949 = vmatprep.subr.mxu0 0.0
    %950 = vmatpush1.msra.mxu0 %v903
    %951 = vmatprep.subr.mxu0 0.0
    %952 = vmatpush1.msra.mxu0 %v902
    %953 = vmatprep.subr.mxu0 0.0
    %954 = vmatpush1.msra.mxu0 %v901
    %955 = vmatprep.subr.mxu0 0.0
    %956 = vmatpush1.msra.mxu0 %v900
    %957 = vmatprep.subr.mxu0 0.0
    %958 = vmatpush2.msra.mxu0 0.0
    %959 = vmatprep.subr.mxu0 0.0
    %960 = vmatpush2.msra.mxu0 0.0
    %961 = vmatprep.subr.mxu0 0.0
    %962 = vmatpush2.msra.mxu0 0.0
    %963 = vmatprep.subr.mxu0 0.0
    %964 = vmatpush2.msra.mxu0 0.0
    %965 = vmatprep.subr.mxu0 0.0
    %966 = vmatpush2.msra.mxu0 0.0
    %967 = vmatprep.subr.mxu0 0.0
    %968 = vmatpush2.msra.mxu0 0.0
    %969 = vmatprep.subr.mxu0 0.0
    %970 = vmatpush2.msra.mxu0 0.0
    %971 = vmatprep.subr.mxu0 0.0
    %972 = vmatpush2.msra.mxu0 0.0
    %973 = vmatprep.subr.mxu0 0.0
    %974 = vmatpush2.msra.mxu0 0.0
    %975 = vmatprep.subr.mxu0 0.0
    %976 = vmatpush2.msra.mxu0 0.0
    %977 = vmatprep.subr.mxu0 0.0
    %978 = vmatpush2.msra.mxu0 0.0
    %979 = vmatprep.subr.mxu0 0.0
    %980 = vmatpush2.msra.mxu0 0.0
    %981 = vmatprep.subr.mxu0 0.0
    %982 = vmatpush2.msra.mxu0 0.0
    %983 = vmatprep.subr.mxu0 0.0
    %984 = vmatpush2.msra.mxu0 0.0
    %985 = vmatprep.subr.mxu0 0.0
    %986 = vmatpush2.msra.mxu0 0.0
    %987 = vmatprep.subr.mxu0 0.0
    %988 = vmatpush2.msra.mxu0 0.0
    %989 = vmatprep.mubr.f32.mxu0 0.0
    %990 = vmatmul.mubr.f32.gmra.mxu0 %v920
    %v991 = vpop.f32.mrf.mxu0
    %v992 = vadd.f32 %v917, %v991
    %v993 = vpop.f32.mrf.mxu0
    %994 = vdwg.mxu0
    %v995 = vlaneseq
    %v996 = vand.u32 %v995, 127
    %vm997 = vcmp.lt.s32.totalorder %v996, 8
    %vm998 = vcmp.gt.f32.partialorder %v992, 20.0
    %v999 = vmin.f32 %v992, 20.0
    %v1000 = vmul.f32 %v999, 1.442695
    %v1001 = vpow.pop %v1000
    %v1002 = vadd.f32 %v1001, 1.0
    %v1003 = vlog2.pop %v1002
    %v1004 = vmul.f32 %v1003, 0.6931472
    %v1005 = vmul.f32 -0.5, %v1001
    %v1006 = vadd.f32 %v1005, 1.0
    %v1007 = vmul.f32 %v1006, %v1001
    %v1008 = vand.u32 2147483647, %v1001
    %vm1009 = vcmp.lt.f32.partialorder %v1008, 0.0004427343
    %v1010 = vsel %vm1009, %v1007, %v1004
    %v1011 = vsel %vm998, %v992, %v1010
    %v1012 = vsel %vm997, %v992, %v1011
    %vm1013 = vcmask 123904
    %1014 = vst.msk [vmem:[%s2] sm:$0x3] %vm1013, %v1012
    // Predicated region
    $region14: #{forward.1} parent=1 // pred_check
      _
    $region15: #{forward.1} parent=1 // pred_check_branch
      %1016 = sbr.rel (0) target = $region17
    $region16: #{forward.1} parent=1 // pred_region
      _
    $region17: #{forward.1} parent=1 // pred_fallthru
      _
    // Predicated region
    $region18: #{forward.1} parent=1 // pred_check
      _
    $region19: #{forward.1} parent=1 // pred_check_branch
      %1018 = sbr.rel (0) target = $region21
    $region20: #{forward.1} parent=1 // pred_region
      _
    $region21: #{forward.1} parent=1 // pred_fallthru
      _
    %1019 = vsyncpa [#allocation3], 1

</llo_original>
